<compile_context>
chip_gen: v7x
topology: tpu7x:2x2x1
jax: 0.10.0
libtpu: 0.0.40
codegen_flags: <defaults>
</compile_context>

<pallas_src>
import functools

import jax
import jax.numpy as jnp
from jax import lax
from jax.experimental import pallas as pl
from jax.experimental.pallas import tpu as pltpu


def _affinity_loss_kernel(labels_sref, x_ref, centers_ref, inv_var_ref, out_ref,
                          *, batch, block_b, num_class):
    # labels_sref : (B,) int32        SMEM (scalar prefetch)
    # x_ref       : (TB, C, HW) f32   VMEM  (spatial on lanes)
    # centers_ref : (K, C) f32        VMEM
    # inv_var_ref : (1, 1) f32        VMEM  (1 / centers.var(0, unbiased).sum())
    # out_ref     : (1, 1, 1) f32     VMEM  (partial clamped sum for this tile)
    i = pl.program_id(0)
    base = i * block_b
    hw = x_ref.shape[-1]

    # ---- global average pool over the lane-resident spatial axis -> (TB, C) ----
    x_mean = jnp.sum(x_ref[...], axis=-1) * jnp.float32(1.0 / hw)

    centers = centers_ref[...]            # (K, C)
    inv_var = inv_var_ref[...]            # (1, 1), broadcasts below

    # ---- one-hot(labels) for this tile, built from SMEM scalar reads ----
    # (static unroll: block_b is small; label index clamped so the edge tile
    #  never reads SMEM out of bounds)
    row_iota = lax.broadcasted_iota(jnp.int32, (block_b, num_class), 0)
    col_iota = lax.broadcasted_iota(jnp.int32, (block_b, num_class), 1)
    onehot = jnp.zeros((block_b, num_class), jnp.float32)
    for r in range(block_b):
        idx = jnp.minimum(base + r, batch - 1)
        lbl = labels_sref[idx]
        onehot = onehot + jnp.where((row_iota == r) & (col_iota == lbl), 1.0, 0.0)

    # ---- gather centers[labels] via the tiny one-hot matmul -> (TB, C) ----
    c_sel = jnp.dot(onehot, centers, preferred_element_type=jnp.float32)

    # ---- per-sample squared distance, same expanded form as the module ----
    x_sq = jnp.sum(x_mean * x_mean, axis=-1, keepdims=True)   # (TB, 1)
    c_sq = jnp.sum(c_sel * c_sel, axis=-1, keepdims=True)     # (TB, 1)
    xc = jnp.sum(x_mean * c_sel, axis=-1, keepdims=True)      # (TB, 1)
    d = (x_sq + c_sq - 2.0 * xc) * inv_var                    # (TB, 1)
    d = jnp.clip(d, 1e-12, 1e12)

    # mask rows past the true batch size (edge tile may read undefined data)
    rows = base + lax.broadcasted_iota(jnp.int32, (block_b, 1), 0)
    d = jnp.where(rows < batch, d, 0.0)

    out_ref[...] = jnp.sum(d).reshape(1, 1, 1)


def affinity_loss(x_nchw, labels, centers, *, block_b=None):
    """x_nchw: (B, C, H, W) f32, labels: (B,) int, centers: (K, C) f32 -> scalar loss."""
    B, C, H, W = x_nchw.shape
    K, feat = centers.shape
    assert feat == C
    HW = H * W

    # Free reshape of contiguous NCHW (no transpose / extra HBM pass):
    # channels on sublanes, flattened spatial on lanes.
    x = x_nchw.reshape(B, C, HW)
    labels_i32 = labels.reshape(B).astype(jnp.int32)

    # centers.var(dim=0, unbiased=True).sum(): O(K*C) parameter-only statistic,
    # hoisted out of the per-tile loop; pass the reciprocal so the kernel multiplies.
    var_sum = jnp.sum(jnp.var(centers, axis=0, ddof=1))
    inv_var = (1.0 / var_sum).reshape(1, 1).astype(jnp.float32)

    # Auto-size the batch tile: 2x (double-buffer) * TB * C * HW * 4B under a
    # conservative budget that leaves headroom inside v7x's 32 MiB scoped VMEM.
    if block_b is None:
        budget = 12 * 1024 * 1024
        row_bytes = C * HW * 4
        block_b = int(max(1, min(B, budget // (2 * row_bytes), 32)))
    block_b = int(max(1, min(block_b, B)))
    num_tiles = (B + block_b - 1) // block_b

    kernel = functools.partial(_affinity_loss_kernel,
                               batch=B, block_b=block_b, num_class=K)

    grid_spec = pltpu.PrefetchScalarGridSpec(
        num_scalar_prefetch=1,                     # labels -> SMEM
        grid=(num_tiles,),
        in_specs=[
            pl.BlockSpec((block_b, C, HW), lambda i, lab: (i, 0, 0)),   # x tile
            pl.BlockSpec((K, C), lambda i, lab: (0, 0)),                # centers (resident)
            pl.BlockSpec((1, 1), lambda i, lab: (0, 0)),                # 1/var_sum
        ],
        out_specs=pl.BlockSpec((1, 1, 1), lambda i, lab: (i, 0, 0)),    # partial sums
    )

    cost = pl.CostEstimate(
        flops=int(2 * B * C * HW + 2 * B * K * C + 8 * B * C),
        transcendentals=0,
        bytes_accessed=int(B * C * HW * 4 + K * C * 4 + B * 4 + num_tiles * 4),
    )

    partials = pl.pallas_call(
        kernel,
        grid_spec=grid_spec,
        out_shape=jax.ShapeDtypeStruct((num_tiles, 1, 1), jnp.float32),
        compiler_params=pltpu.CompilerParams(
            dimension_semantics=("parallel",),       # shard batch tiles on megacore
            vmem_limit_bytes=32 * 1024 * 1024,
        ),
        cost_estimate=cost,
    )(labels_i32, x, centers, inv_var)

    # Every masked-out (i, j != labels[i]) entry clamps from 0 to exactly 1e-12
    # in the PyTorch module; add that constant analytically.
    const = jnp.float32(B * (K - 1) * 1e-12)
    return (jnp.sum(partials) + const) / jnp.float32(B)


def _reference(x_nchw, labels, centers):
    """Pure-JAX reference mirroring the PyTorch forward."""
    B, C, H, W = x_nchw.shape
    K, _ = centers.shape
    x = jnp.mean(x_nchw, axis=(2, 3))                              # GAP -> (B, C)
    distmat = (jnp.sum(x ** 2, axis=1, keepdims=True)
               + jnp.sum(centers ** 2, axis=1, keepdims=True).T
               - 2.0 * x @ centers.T)
    mask = (labels[:, None] == jnp.arange(K)[None, :]).astype(jnp.float32)
    var_sum = jnp.sum(jnp.var(centers, axis=0, ddof=1))
    dist = distmat * mask / var_sum
    return jnp.sum(jnp.clip(dist, 1e-12, 1e12)) / B


if __name__ == "__main__":
    NUM_CLASS, FEAT_DIM = 8, 32

    key = jax.random.PRNGKey(0)
    kx, kl, kc, kx2, kl2 = jax.random.split(key, 5)
    centers = jax.random.normal(kc, (NUM_CLASS, FEAT_DIM), dtype=jnp.float32)

    # Test 1: batch=2 (single tile, auto block size)
    B, C, H, W = 2, FEAT_DIM, 16, 16
    x = jax.random.normal(kx, (B, C, H, W), dtype=jnp.float32)
    labels = jax.random.randint(kl, (B,), 0, NUM_CLASS, dtype=jnp.int32)
    loss = jax.block_until_ready(affinity_loss(x, labels, centers))
    ref = jax.block_until_ready(_reference(x, labels, centers))
    assert jnp.allclose(loss, ref, rtol=1e-5, atol=1e-5), (loss, ref)

    # Test 2: ragged batch (5) with forced block_b=2 -> 3 grid steps + edge masking
    B2 = 5
    x2 = jax.random.normal(kx2, (B2, C, H, W), dtype=jnp.float32)
    labels2 = jax.random.randint(kl2, (B2,), 0, NUM_CLASS, dtype=jnp.int32)
    loss2 = jax.block_until_ready(affinity_loss(x2, labels2, centers, block_b=2))
    ref2 = jax.block_until_ready(_reference(x2, labels2, centers))
    assert jnp.allclose(loss2, ref2, rtol=1e-5, atol=1e-5), (loss2, ref2)

    print("KERNEL_OK")
</pallas_src>

<mosaic_0001>
module attributes {stable_mosaic.version = 11 : i64} {
  func.func @_affinity_loss_kernel(%arg0: i32, %arg1: memref<2xi32, #tpu.memory_space<smem>>, %arg2: memref<2x32x256xf32, #tpu.memory_space<vmem>>, %arg3: memref<8x32xf32, #tpu.memory_space<vmem>>, %arg4: memref<1x1xf32, #tpu.memory_space<vmem>>, %arg5: memref<1x1x1xf32, #tpu.memory_space<vmem>>) attributes {dimension_semantics = [#tpu.dimension_semantics<parallel>], iteration_bounds = array<i64: 1>, scalar_prefetch = 1 : i64, scratch_operands = 0 : i64, tpu.core_type = #tpu.core_type<tc>, window_params = [{transform_indices = @transform_0, window_bounds = array<i64: 2, 32, 256>}, {pipeline_mode = #tpu.pipeline_mode<synchronous>, transform_indices = @transform_1, window_bounds = array<i64: 8, 32>}, {pipeline_mode = #tpu.pipeline_mode<synchronous>, transform_indices = @transform_2, window_bounds = array<i64: 1, 1>}, {transform_indices = @transform_3, window_bounds = array<i64: 1, 1, 1>}]} {
    %c2_i32 = arith.constant 2 : i32
    %0 = arith.muli %arg0, %c2_i32 : i32
    %c0 = arith.constant 0 : index
    %c0_0 = arith.constant 0 : index
    %c0_1 = arith.constant 0 : index
    %1 = vector.load %arg2[%c0, %c0_0, %c0_1] : memref<2x32x256xf32, #tpu.memory_space<vmem>>, vector<2x32x256xf32>
    %cst = arith.constant dense<0.000000e+00> : vector<2x32xf32>
    %2 = vector.multi_reduction <add>, %1, %cst [2] : vector<2x32x256xf32> to vector<2x32xf32>
    %cst_2 = arith.constant 3.906250e-03 : f32
    %3 = vector.broadcast %cst_2 : f32 to vector<2x32xf32>
    %4 = arith.mulf %2, %3 : vector<2x32xf32>
    %c0_3 = arith.constant 0 : index
    %c0_4 = arith.constant 0 : index
    %5 = vector.load %arg3[%c0_3, %c0_4] : memref<8x32xf32, #tpu.memory_space<vmem>>, vector<8x32xf32>
    %c0_5 = arith.constant 0 : index
    %c0_6 = arith.constant 0 : index
    %6 = vector.load %arg4[%c0_5, %c0_6] : memref<1x1xf32, #tpu.memory_space<vmem>>, vector<1x1xf32>
    %7 = tpu.iota {dimensions = array<i32: 0>} : vector<2x8xi32>
    %8 = tpu.iota {dimensions = array<i32: 1>} : vector<2x8xi32>
    %cst_7 = arith.constant 0.000000e+00 : f32
    %9 = vector.broadcast %cst_7 : f32 to vector<2x8xf32>
    %c0_i32 = arith.constant 0 : i32
    %10 = arith.addi %0, %c0_i32 : i32
    %c1_i32 = arith.constant 1 : i32
    %11 = arith.minsi %10, %c1_i32 : i32
    %12 = arith.index_cast %11 : i32 to index
    %13 = memref.load %arg1[%12] : memref<2xi32, #tpu.memory_space<smem>>
    %c0_i32_8 = arith.constant 0 : i32
    %14 = vector.broadcast %c0_i32_8 : i32 to vector<2x8xi32>
    %15 = arith.cmpi eq, %7, %14 : vector<2x8xi32>
    %16 = vector.broadcast %13 : i32 to vector<2x8xi32>
    %17 = arith.cmpi eq, %8, %16 : vector<2x8xi32>
    %18 = arith.andi %15, %17 : vector<2x8xi1>
    %cst_9 = arith.constant 1.000000e+00 : f32
    %cst_10 = arith.constant 0.000000e+00 : f32
    %19 = vector.broadcast %cst_9 : f32 to vector<2x8xf32>
    %20 = vector.broadcast %cst_10 : f32 to vector<2x8xf32>
    %21 = arith.select %18, %19, %20 : vector<2x8xi1>, vector<2x8xf32>
    %22 = arith.addf %9, %21 : vector<2x8xf32>
    %c1_i32_11 = arith.constant 1 : i32
    %23 = arith.addi %0, %c1_i32_11 : i32
    %c1_i32_12 = arith.constant 1 : i32
    %24 = arith.minsi %23, %c1_i32_12 : i32
    %25 = arith.index_cast %24 : i32 to index
    %26 = memref.load %arg1[%25] : memref<2xi32, #tpu.memory_space<smem>>
    %c1_i32_13 = arith.constant 1 : i32
    %27 = vector.broadcast %c1_i32_13 : i32 to vector<2x8xi32>
    %28 = arith.cmpi eq, %7, %27 : vector<2x8xi32>
    %29 = vector.broadcast %26 : i32 to vector<2x8xi32>
    %30 = arith.cmpi eq, %8, %29 : vector<2x8xi32>
    %31 = arith.andi %28, %30 : vector<2x8xi1>
    %cst_14 = arith.constant 1.000000e+00 : f32
    %cst_15 = arith.constant 0.000000e+00 : f32
    %32 = vector.broadcast %cst_14 : f32 to vector<2x8xf32>
    %33 = vector.broadcast %cst_15 : f32 to vector<2x8xf32>
    %34 = arith.select %31, %32, %33 : vector<2x8xi1>, vector<2x8xf32>
    %35 = arith.addf %22, %34 : vector<2x8xf32>
    %cst_16 = arith.constant dense<0.000000e+00> : vector<2x32xf32>
    %36 = tpu.matmul %35, %5, %cst_16 {dimension_numbers = #tpu.dot_dimension_numbers<[1], [0], [0], [1], [0, 0, 1, 1], [], []>} : vector<2x8xf32>, vector<8x32xf32>, vector<2x32xf32> -> vector<2x32xf32>
    %37 = arith.mulf %4, %4 : vector<2x32xf32>
    %cst_17 = arith.constant dense<0.000000e+00> : vector<2xf32>
    %38 = vector.multi_reduction <add>, %37, %cst_17 [1] : vector<2x32xf32> to vector<2xf32>
    %39 = vector.shape_cast %38 : vector<2xf32> to vector<2x1xf32>
    %40 = arith.mulf %36, %36 : vector<2x32xf32>
    %cst_18 = arith.constant dense<0.000000e+00> : vector<2xf32>
    %41 = vector.multi_reduction <add>, %40, %cst_18 [1] : vector<2x32xf32> to vector<2xf32>
    %42 = vector.shape_cast %41 : vector<2xf32> to vector<2x1xf32>
    %43 = arith.mulf %4, %36 : vector<2x32xf32>
    %cst_19 = arith.constant dense<0.000000e+00> : vector<2xf32>
    %44 = vector.multi_reduction <add>, %43, %cst_19 [1] : vector<2x32xf32> to vector<2xf32>
    %45 = vector.shape_cast %44 : vector<2xf32> to vector<2x1xf32>
    %46 = arith.addf %39, %42 : vector<2x1xf32>
    %cst_20 = arith.constant 2.000000e+00 : f32
    %47 = vector.broadcast %cst_20 : f32 to vector<2x1xf32>
    %48 = arith.mulf %47, %45 : vector<2x1xf32>
    %49 = arith.subf %46, %48 : vector<2x1xf32>
    %50 = vector.broadcast %6 : vector<1x1xf32> to vector<2x1xf32>
    %51 = arith.mulf %49, %50 : vector<2x1xf32>
    %cst_21 = arith.constant 9.99999996E-13 : f32
    %cst_22 = arith.constant 9.99999995E+11 : f32
    %52 = vector.broadcast %cst_21 : f32 to vector<2x1xf32>
    %53 = arith.maximumf %52, %51 : vector<2x1xf32>
    %54 = vector.broadcast %cst_22 : f32 to vector<2x1xf32>
    %55 = arith.minimumf %54, %53 : vector<2x1xf32>
    %56 = tpu.iota {dimensions = array<i32: 0>} : vector<2x1xi32>
    %57 = vector.broadcast %0 : i32 to vector<2x1xi32>
    %58 = arith.addi %57, %56 : vector<2x1xi32>
    %c2_i32_23 = arith.constant 2 : i32
    %59 = vector.broadcast %c2_i32_23 : i32 to vector<2x1xi32>
    %60 = arith.cmpi slt, %58, %59 : vector<2x1xi32>
    %cst_24 = arith.constant 0.000000e+00 : f32
    %61 = vector.broadcast %cst_24 : f32 to vector<2x1xf32>
    %62 = arith.select %60, %55, %61 : vector<2x1xi1>, vector<2x1xf32>
    %63 = vector.shape_cast %62 : vector<2x1xf32> to vector<1x2x1xf32>
    %cst_25 = arith.constant dense<0.000000e+00> : vector<1xf32>
    %64 = vector.multi_reduction <add>, %63, %cst_25 [1, 2] : vector<1x2x1xf32> to vector<1xf32>
    %65 = vector.shape_cast %64 : vector<1xf32> to vector<1x1x1xf32>
    %66 = vector.extract %65[0, 0, 0] : f32 from vector<1x1x1xf32>
    %67 = vector.broadcast %66 : f32 to vector<1x1x1xf32>
    %c0_26 = arith.constant 0 : index
    %c0_27 = arith.constant 0 : index
    %c0_28 = arith.constant 0 : index
    %68 = vector.load %arg5[%c0_26, %c0_27, %c0_28] : memref<1x1x1xf32, #tpu.memory_space<vmem>>, vector<1x1x1xf32>
    tpu.vector_store %arg5[%c0_26, %c0_27, %c0_28], %67 {strides = array<i32>} : memref<1x1x1xf32, #tpu.memory_space<vmem>>, vector<1x1x1xf32>,
    return
  }
  func.func @transform_0(%arg0: i32, %arg1: memref<2xi32, #tpu.memory_space<smem>>) -> (i32, i32, i32) {
    %c0_i32 = arith.constant 0 : i32
    %c0_i32_0 = arith.constant 0 : i32
    %c0_i32_1 = arith.constant 0 : i32
    return %arg0, %c0_i32, %c0_i32_0 : i32, i32, i32
  }
  func.func @transform_1(%arg0: i32, %arg1: memref<2xi32, #tpu.memory_space<smem>>) -> (i32, i32) {
    %c0_i32 = arith.constant 0 : i32
    %c0_i32_0 = arith.constant 0 : i32
    %c0_i32_1 = arith.constant 0 : i32
    return %c0_i32, %c0_i32_0 : i32, i32
  }
  func.func @transform_2(%arg0: i32, %arg1: memref<2xi32, #tpu.memory_space<smem>>) -> (i32, i32) {
    %c0_i32 = arith.constant 0 : i32
    %c0_i32_0 = arith.constant 0 : i32
    %c0_i32_1 = arith.constant 0 : i32
    return %c0_i32, %c0_i32_0 : i32, i32
  }
  func.func @transform_3(%arg0: i32, %arg1: memref<2xi32, #tpu.memory_space<smem>>) -> (i32, i32, i32) {
    %c0_i32 = arith.constant 0 : i32
    %c0_i32_0 = arith.constant 0 : i32
    %c0_i32_1 = arith.constant 0 : i32
    return %arg0, %c0_i32, %c0_i32_0 : i32, i32, i32
  }
}

</mosaic_0001>

<llo_original>
// kernel: tpu_custom_call.1
$region0: #{tpu_custom_call.1}
  #allocation0 [shape = 'u32[]', space=smem, size = 0x4, offset = 0x4, fixed_abs, tag = 'smem constant byte address 0x4 - core index']
  #allocation1 [shape = 'u32[144,128]{1,0:T(1,128)}', space=vmem, size = 0x12000, scoped, tag = 'internal scratch']
  #allocation2 [shape = 's32[1]{0}', space=sflag, size = 0x4, scoped, tag = 'scoped memory for tpu_custom_call.1']
  #allocation3 [shape = 'u8[512]{0}', space=smem, size = 0x200, scoped, tag = 'prefetched SMEM operand 0']
  #allocation4 [shape = 'f32[1,1]{1,0:T(1,128)S(1)}', space=vmem, size = 0x200, scoped, tag = 'scoped memory for tpu_custom_call.1']
  %s0 = inlined_call_operand.vmem [shape: s32[2], index: 0, kind: input, shape index: {}]
  %s1 = inlined_call_operand.hbm [shape: f32[2,32,256], index: 1, kind: input, shape index: {}]
  %s2 = inlined_call_operand.vmem [shape: f32[8,32], index: 2, kind: input, shape index: {}]
  %s3 = inlined_call_operand.<no memory space> [shape: f32[1,1], index: 3, kind: input, shape index: {}]
  %s4 = inlined_call_operand.hbm [shape: f32[1,1,1], index: 4, kind: output, shape index: {}]
  %s5 = sld [smem:[#allocation0]]
  $region26: #{tpu_custom_call.1} parent=0
    _
  %s7 = ssub.s32 1, %s5
  %s8 = scalar_select 0, %s7, %s5
  %s9 = sshll.u32 %s0, 4
  %s10 = int_to_ptr.vmem [resolvable:$true] %s9
  %12 = dma.vmem_to_smem %s10, 16, [#allocation3], [#allocation2]
  %v13 = vstv %s3
  %14 = vst [vmem:[#allocation4] sm:$0x1] %v13
  %15 = dma.done [#allocation2], 16
  %16 = sfence
  $region1: #{tpu_custom_call.1} parent=0
    #allocation5 [shape = 'u8[65536]{0}', space=vmem, size = 0x10000, scoped, tag = 'input window, operand 1, single buffered']
    #allocation6 [shape = 's32[1]{0}', space=sflag, size = 0x4, scoped, tag = 'scoped memory for tpu_custom_call.1']
    #allocation7 [shape = 's32[1]{0}', space=sflag, size = 0x4, scoped, tag = 'scoped memory for tpu_custom_call.1']
    #allocation8 [shape = 'u8[512]{0}', space=vmem, size = 0x400, scoped, tag = 'output window, operand 0, single buffered']
    %17 = vsyncpa [#allocation6], 0
    %18 = vsyncpa [#allocation7], 0
    // Predicated region
    $region2: #{tpu_custom_call.1} parent=1 // pred_check
      _
    $region3: #{tpu_custom_call.1} parent=1 // pred_check_branch
      %20 = sbr.rel (0) target = $region5
    $region4: #{tpu_custom_call.1} parent=1 // pred_region
      %s22 = ssub.s32 2048, 2048
      %23 = vsyncadd [#allocation6], %s22
      %s24 = sshll.u32 [#allocation5], 4
      %s25 = int_to_ptr.vmem [resolvable:$true] %s24
      %30 = dma.hbm_to_vmem [thread:$0]  %s1, 2048, %s25, [#allocation6], 256, 256, 16
    $region5: #{tpu_custom_call.1} parent=1 // pred_fallthru
      _
    // Predicated region
    $region6: #{tpu_custom_call.1} parent=1 // pred_check
      _
    $region7: #{tpu_custom_call.1} parent=1 // pred_check_branch
      %32 = sbr.rel (0) target = $region9
    $region8: #{tpu_custom_call.1} parent=1 // pred_region
      _
    $region9: #{tpu_custom_call.1} parent=1 // pred_fallthru
      _
    // Predicated region
    $region10: #{tpu_custom_call.1} parent=1 // pred_check
      _
    $region11: #{tpu_custom_call.1} parent=1 // pred_check_branch
      %34 = sbr.rel (0) target = $region13
    $region12: #{tpu_custom_call.1} parent=1 // pred_region
      _
    $region13: #{tpu_custom_call.1} parent=1 // pred_fallthru
      _
    // Predicated region
    $region14: #{tpu_custom_call.1} parent=1 // pred_check
      _
    $region15: #{tpu_custom_call.1} parent=1 // pred_check_branch
      %36 = sbr.rel (0) target = $region17
    $region16: #{tpu_custom_call.1} parent=1 // pred_region
      %37 = dma.done [#allocation6], 2048
    $region17: #{tpu_custom_call.1} parent=1 // pred_fallthru
      _
    %s38 = smul.u32 0, 2
    %v39 = vld [vmem:[#allocation5] sm:$0xff]
    %v40 = vld [vmem:[#allocation5 + $0x8] sm:$0xff]
    %v41 = vld [vmem:[#allocation5 + $0x10] sm:$0xff]
    %v42 = vld [vmem:[#allocation5 + $0x18] sm:$0xff]
    %v43 = vld [vmem:[#allocation5 + $0x20] sm:$0xff]
    %v44 = vld [vmem:[#allocation5 + $0x28] sm:$0xff]
    %v45 = vld [vmem:[#allocation5 + $0x30] sm:$0xff]
    %v46 = vld [vmem:[#allocation5 + $0x38] sm:$0xff]
    %v47 = vld [vmem:[#allocation5 + $0x40] sm:$0xff]
    %v48 = vld [vmem:[#allocation5 + $0x48] sm:$0xff]
    %v49 = vld [vmem:[#allocation5 + $0x50] sm:$0xff]
    %v50 = vld [vmem:[#allocation5 + $0x58] sm:$0xff]
    %v51 = vld [vmem:[#allocation5 + $0x60] sm:$0xff]
    %v52 = vld [vmem:[#allocation5 + $0x68] sm:$0xff]
    %v53 = vld [vmem:[#allocation5 + $0x70] sm:$0xff]
    %v54 = vld [vmem:[#allocation5 + $0x78] sm:$0xff]
    %v55 = vadd.f32 %v39, %v40
    %56 = vadd.xlane.f32.xlu0 %v55
    %v57 = vpop.xlane.xlu0 %56
    %v58 = vadd.f32 %v41, %v42
    %59 = vadd.xlane.f32.xlu0 %v58
    %v60 = vpop.xlane.xlu0 %59
    %v61 = vadd.f32 %v43, %v44
    %62 = vadd.xlane.f32.xlu0 %v61
    %v63 = vpop.xlane.xlu0 %62
    %v64 = vadd.f32 %v45, %v46
    %65 = vadd.xlane.f32.xlu0 %v64
    %v66 = vpop.xlane.xlu0 %65
    %v67 = vadd.f32 %v47, %v48
    %68 = vadd.xlane.f32.xlu0 %v67
    %v69 = vpop.xlane.xlu0 %68
    %v70 = vadd.f32 %v49, %v50
    %71 = vadd.xlane.f32.xlu0 %v70
    %v72 = vpop.xlane.xlu0 %71
    %v73 = vadd.f32 %v51, %v52
    %74 = vadd.xlane.f32.xlu0 %v73
    %v75 = vpop.xlane.xlu0 %74
    %v76 = vadd.f32 %v53, %v54
    %77 = vadd.xlane.f32.xlu0 %v76
    %v78 = vpop.xlane.xlu0 %77
    %v79 = vmul.f32 %v57, 0.00390625
    %v80 = vmul.f32 %v60, 0.00390625
    %v81 = vmul.f32 %v63, 0.00390625
    %v82 = vmul.f32 %v66, 0.00390625
    %v83 = vmul.f32 %v69, 0.00390625
    %v84 = vmul.f32 %v72, 0.00390625
    %v85 = vmul.f32 %v75, 0.00390625
    %v86 = vmul.f32 %v78, 0.00390625
    %v87 = vld [vmem:[%s2] sm:$0xff]
    %v88 = vld [vmem:[#allocation4] sm:$0x1]
    %v89 = vlaneseq
    %v90 = vshrl.u32 %v89, 7
    %v91 = vlaneseq
    %v92 = vand.u32 %v91, 127
    %p93 = scmp.lt.s32.totalorder %s38, 1
    %s94 = scalar_select %p93, %s38, 1
    %s95 = sld [smem:[#allocation3 + %s94]]
    %vm96 = vcmp.eq.s32.totalorder %v90, 0
    %v97 = vstv %s95
    %vm98 = vcmp.eq.s32.totalorder %v92, %v97
    %vm99 = vmand %vm96, %vm98
    %v100 = vsel %vm99, 1.0, 0.0
    %v101 = vadd.f32 %v100, 0.0
    %s102 = sadd.s32 %s38, 1
    %p103 = scmp.lt.s32.totalorder %s102, 1
    %s104 = scalar_select %p103, %s102, 1
    %s105 = sld [smem:[#allocation3 + %s104]]
    %vm106 = vcmp.eq.s32.totalorder %v90, 1
    %v107 = vstv %s105
    %vm108 = vcmp.eq.s32.totalorder %v92, %v107
    %vm109 = vmand %vm106, %vm108
    %v110 = vsel %vm109, 1.0, 0.0
    %v111 = vadd.f32 %v101, %v110
    %vm112 = vcmask 64512
    %v114 = vsel %vm112, %v111, 0
    %116 = vmatprep.subr.mxu0 0.0
    %117 = vmatpush1.msra.mxu0 %v87
    %118 = vmatprep.subr.mxu0 0.0
    %119 = vmatpush1.msra.mxu0 0.0
    %120 = vmatprep.subr.mxu0 0.0
    %121 = vmatpush1.msra.mxu0 0.0
    %122 = vmatprep.subr.mxu0 0.0
    %123 = vmatpush1.msra.mxu0 0.0
    %124 = vmatprep.subr.mxu0 0.0
    %125 = vmatpush1.msra.mxu0 0.0
    %126 = vmatprep.subr.mxu0 0.0
    %127 = vmatpush1.msra.mxu0 0.0
    %128 = vmatprep.subr.mxu0 0.0
    %129 = vmatpush1.msra.mxu0 0.0
    %130 = vmatprep.subr.mxu0 0.0
    %131 = vmatpush1.msra.mxu0 0.0
    %132 = vmatprep.subr.mxu0 0.0
    %133 = vmatpush1.msra.mxu0 0.0
    %134 = vmatprep.subr.mxu0 0.0
    %135 = vmatpush1.msra.mxu0 0.0
    %136 = vmatprep.subr.mxu0 0.0
    %137 = vmatpush1.msra.mxu0 0.0
    %138 = vmatprep.subr.mxu0 0.0
    %139 = vmatpush1.msra.mxu0 0.0
    %140 = vmatprep.subr.mxu0 0.0
    %141 = vmatpush1.msra.mxu0 0.0
    %142 = vmatprep.subr.mxu0 0.0
    %143 = vmatpush1.msra.mxu0 0.0
    %144 = vmatprep.subr.mxu0 0.0
    %145 = vmatpush1.msra.mxu0 0.0
    %146 = vmatprep.subr.mxu0 0.0
    %147 = vmatpush1.msra.mxu0 0.0
    %148 = vmatprep.subr.mxu0 0.0
    %149 = vmatpush1.msra.mxu0 0.0
    %150 = vmatprep.subr.mxu0 0.0
    %151 = vmatpush1.msra.mxu0 0.0
    %152 = vmatprep.subr.mxu0 0.0
    %153 = vmatpush1.msra.mxu0 0.0
    %154 = vmatprep.subr.mxu0 0.0
    %155 = vmatpush1.msra.mxu0 0.0
    %156 = vmatprep.subr.mxu0 0.0
    %157 = vmatpush1.msra.mxu0 0.0
    %158 = vmatprep.subr.mxu0 0.0
    %159 = vmatpush1.msra.mxu0 0.0
    %160 = vmatprep.subr.mxu0 0.0
    %161 = vmatpush1.msra.mxu0 0.0
    %162 = vmatprep.subr.mxu0 0.0
    %163 = vmatpush1.msra.mxu0 0.0
    %164 = vmatprep.subr.mxu0 0.0
    %165 = vmatpush1.msra.mxu0 0.0
    %166 = vmatprep.subr.mxu0 0.0
    %167 = vmatpush1.msra.mxu0 0.0
    %168 = vmatprep.subr.mxu0 0.0
    %169 = vmatpush1.msra.mxu0 0.0
    %170 = vmatprep.subr.mxu0 0.0
    %171 = vmatpush1.msra.mxu0 0.0
    %172 = vmatprep.subr.mxu0 0.0
    %173 = vmatpush1.msra.mxu0 0.0
    %174 = vmatprep.subr.mxu0 0.0
    %175 = vmatpush1.msra.mxu0 0.0
    %176 = vmatprep.subr.mxu0 0.0
    %177 = vmatpush1.msra.mxu0 0.0
    %178 = vmatprep.subr.mxu0 0.0
    %179 = vmatpush1.msra.mxu0 0.0
    %180 = vmatprep.mubr.f32.mxu0 0.0
    %181 = vmatmul.mubr.f32.gmra.mrb[0].mxu0 %v114
    %v182 = vpop.f32.mrb[0].mxu0
    %v183 = vadd.f32 0.0, %v182
    %v184 = vpop.f32.mrb[0].mxu0
    %185 = vdwg.mxu0
    %v186 = vmul.f32 %v79, %v79
    %v187 = vmul.f32 %v80, %v80
    %v188 = vmul.f32 %v81, %v81
    %v189 = vmul.f32 %v82, %v82
    %v190 = vmul.f32 %v83, %v83
    %v191 = vmul.f32 %v84, %v84
    %v192 = vmul.f32 %v85, %v85
    %v193 = vmul.f32 %v86, %v86
    %v202 = vlaneseq
    %v203 = vshrl.u32 %v202, 7
    %v204 = vsub.s32 %v92, %v203
    %v205 = vrot.slane %v186, %v204
    %v206 = vadd.s32 %v92, 4294967288
    %v207 = vlaneseq
    %v208 = vshrl.u32 %v207, 7
    %v209 = vsub.s32 %v206, %v208
    %v210 = vrot.slane %v187, %v209
    %vm211 = vcmask 130112
    %v212 = vsel %vm211, %v210, %v205
    %v213 = vadd.s32 %v92, 4294967280
    %v214 = vlaneseq
    %v215 = vshrl.u32 %v214, 7
    %v216 = vsub.s32 %v213, %v215
    %v217 = vrot.slane %v188, %v216
    %vm218 = vcmask 195712
    %v219 = vsel %vm218, %v217, %v212
    %v220 = vadd.s32 %v92, 4294967272
    %v221 = vlaneseq
    %v222 = vshrl.u32 %v221, 7
    %v223 = vsub.s32 %v220, %v222
    %v224 = vrot.slane %v189, %v223
    %vm225 = vcmask 261312
    %v226 = vsel %vm225, %v224, %v219
    %v227 = vlaneseq
    %v228 = vshrl.u32 %v227, 7
    %v229 = vsub.s32 %v92, %v228
    %v230 = vrot.slane %v190, %v229
    %v231 = vlaneseq
    %v232 = vshrl.u32 %v231, 7
    %v233 = vsub.s32 %v206, %v232
    %v234 = vrot.slane %v191, %v233
    %v235 = vsel %vm211, %v234, %v230
    %v236 = vlaneseq
    %v237 = vshrl.u32 %v236, 7
    %v238 = vsub.s32 %v213, %v237
    %v239 = vrot.slane %v192, %v238
    %v240 = vsel %vm218, %v239, %v235
    %v241 = vlaneseq
    %v242 = vshrl.u32 %v241, 7
    %v243 = vsub.s32 %v220, %v242
    %v244 = vrot.slane %v193, %v243
    %v245 = vsel %vm225, %v244, %v240
    %vm246 = vcmask 1041409
    %v247 = vsel %vm246, %v245, %v226
    %vm249 = vcmask 254976
    %v250 = vsel %vm249, %v247, 0.0
    %251 = vadd.xlane.f32.xlu0 %v250
    %v252 = vpop.xlane.xlu0 %251
    %v253 = vmul.f32 %v183, %v183
    %v254 = vsel %vm249, %v253, 0.0
    %255 = vadd.xlane.f32.xlu0 %v254
    %v256 = vpop.xlane.xlu0 %255
    %v258 = vlaneseq
    %v259 = vshrl.u32 %v258, 7
    %v260 = vsub.s32 0, %v259
    %v261 = vrot.slane %v183, %v260
    %263 = vbcast.lane.b32.xlu0 %v261, 256
    %v264 = vpop.permute.xlu0 %263
    %s266 = sor.u32 256, 8
    %267 = vbcast.lane.b32.xlu0 %v261, %s266
    %v268 = vpop.permute.xlu0 %267
    %s270 = sor.u32 256, 16
    %271 = vbcast.lane.b32.xlu0 %v261, %s270
    %v272 = vpop.permute.xlu0 %271
    %s274 = sor.u32 256, 24
    %275 = vbcast.lane.b32.xlu0 %v261, %s274
    %v276 = vpop.permute.xlu0 %275
    %v277 = vlaneseq
    %v278 = vshrl.u32 %v277, 7
    %v279 = vsub.s32 1, %v278
    %v280 = vrot.slane %v183, %v279
    %282 = vbcast.lane.b32.xlu0 %v280, 256
    %v283 = vpop.permute.xlu0 %282
    %s285 = sor.u32 256, 8
    %286 = vbcast.lane.b32.xlu0 %v280, %s285
    %v287 = vpop.permute.xlu0 %286
    %s289 = sor.u32 256, 16
    %290 = vbcast.lane.b32.xlu0 %v280, %s289
    %v291 = vpop.permute.xlu0 %290
    %s293 = sor.u32 256, 24
    %294 = vbcast.lane.b32.xlu0 %v280, %s293
    %v295 = vpop.permute.xlu0 %294
    %v304 = vmul.f32 %v79, %v264
    %v305 = vmul.f32 %v80, %v268
    %v306 = vmul.f32 %v81, %v272
    %v307 = vmul.f32 %v82, %v276
    %v308 = vmul.f32 %v83, %v283
    %v309 = vmul.f32 %v84, %v287
    %v310 = vmul.f32 %v85, %v291
    %v311 = vmul.f32 %v86, %v295
    %320 = vset.pattern.permute.xlu0 0
    %321 = vperm.xlu0 %320, %v304
    %v322 = vpop.permute.xlu0 %321
    %323 = vset.pattern.permute.xlu0 0
    %324 = vperm.xlu0 %323, %v305
    %v325 = vpop.permute.xlu0 %324
    %326 = vset.pattern.permute.xlu0 0
    %327 = vperm.xlu0 %326, %v306
    %v328 = vpop.permute.xlu0 %327
    %329 = vset.pattern.permute.xlu0 0
    %330 = vperm.xlu0 %329, %v307
    %v331 = vpop.permute.xlu0 %330
    %332 = vset.pattern.permute.xlu0 0
    %333 = vperm.xlu0 %332, %v308
    %v334 = vpop.permute.xlu0 %333
    %335 = vset.pattern.permute.xlu0 0
    %336 = vperm.xlu0 %335, %v309
    %v337 = vpop.permute.xlu0 %336
    %338 = vset.pattern.permute.xlu0 0
    %339 = vperm.xlu0 %338, %v310
    %v340 = vpop.permute.xlu0 %339
    %341 = vset.pattern.permute.xlu0 0
    %342 = vperm.xlu0 %341, %v311
    %v343 = vpop.permute.xlu0 %342
    %v344 = vlaneseq
    %v345 = vshrl.u32 %v344, 7
    %v346 = vsub.s32 %v92, %v345
    %v347 = vrot.slane %v322, %v346
    %v348 = vlaneseq
    %v349 = vshrl.u32 %v348, 7
    %v350 = vsub.s32 %v206, %v349
    %v351 = vrot.slane %v325, %v350
    %v352 = vsel %vm211, %v351, %v347
    %v353 = vlaneseq
    %v354 = vshrl.u32 %v353, 7
    %v355 = vsub.s32 %v213, %v354
    %v356 = vrot.slane %v328, %v355
    %v357 = vsel %vm218, %v356, %v352
    %v358 = vlaneseq
    %v359 = vshrl.u32 %v358, 7
    %v360 = vsub.s32 %v220, %v359
    %v361 = vrot.slane %v331, %v360
    %v362 = vsel %vm225, %v361, %v357
    %v363 = vlaneseq
    %v364 = vshrl.u32 %v363, 7
    %v365 = vsub.s32 %v92, %v364
    %v366 = vrot.slane %v334, %v365
    %v367 = vlaneseq
    %v368 = vshrl.u32 %v367, 7
    %v369 = vsub.s32 %v206, %v368
    %v370 = vrot.slane %v337, %v369
    %v371 = vsel %vm211, %v370, %v366
    %v372 = vlaneseq
    %v373 = vshrl.u32 %v372, 7
    %v374 = vsub.s32 %v213, %v373
    %v375 = vrot.slane %v340, %v374
    %v376 = vsel %vm218, %v375, %v371
    %v377 = vlaneseq
    %v378 = vshrl.u32 %v377, 7
    %v379 = vsub.s32 %v220, %v378
    %v380 = vrot.slane %v343, %v379
    %v381 = vsel %vm225, %v380, %v376
    %v382 = vsel %vm246, %v381, %v362
    %v384 = vsel %vm249, %v382, 0.0
    %385 = vadd.xlane.f32.xlu0 %v384
    %v386 = vpop.xlane.xlu0 %385
    %v387 = vadd.f32 %v252, %v256
    %v388 = vmul.f32 %v386, 2.0
    %v389 = vsub.f32 %v387, %v388
    %v391 = vlaneseq
    %v392 = vshrl.u32 %v391, 7
    %v393 = vsub.s32 0, %v392
    %v394 = vrot.slane %v88, %v393
    %v396 = vmul.f32 %v389, %v394
    %v397 = vmax.f32 %v396, 1e-12
    %v398 = vmin.f32 %v397, 1e+12
    %v399 = vstv %s38
    %v400 = vadd.s32 %v399, %v90
    %vm401 = vcmp.lt.s32.totalorder %v400, 2
    %v402 = vsel %vm401, %v398, 0.0
    %vm403 = vcmask 1024
    %v404 = vsel %vm403, %v402, 0.0
    %405 = vadd.xlane.f32.xlu0 %v404
    %v406 = vpop.xlane.xlu0 %405
    %v407 = vrot.slane %v406, 4
    %v408 = vadd.f32 %v406, %v407
    %v409 = vrot.slane %v408, 2
    %v410 = vadd.f32 %v408, %v409
    %v411 = vrot.slane %v410, 1
    %v412 = vadd.f32 %v410, %v411
    %s413 = vtos %v412
    %v414 = vstv %s413
    %vm415 = vcmask 0
    %416 = vst.msk [vmem:[#allocation8] sm:$0x1] %vm415, %v414
    // Predicated region
    $region18: #{tpu_custom_call.1} parent=1 // pred_check
      _
    $region19: #{tpu_custom_call.1} parent=1 // pred_check_branch
      %418 = sbr.rel (0) target = $region21
    $region20: #{tpu_custom_call.1} parent=1 // pred_region
      %s420 = ssub.s32 16, 16
      %421 = vsyncadd [#allocation7], %s420
      %s423 = sshll.u32 [#allocation8], 4
      %s424 = int_to_ptr.vmem [resolvable:$true] %s423
      %426 = dma.vmem_to_hbm [thread:$0]  %s424, 16, %s4, [#allocation7]
    $region21: #{tpu_custom_call.1} parent=1 // pred_fallthru
      _
    // Predicated region
    $region22: #{tpu_custom_call.1} parent=1 // pred_check
      _
    $region23: #{tpu_custom_call.1} parent=1 // pred_check_branch
      %428 = sbr.rel (0) target = $region25
    $region24: #{tpu_custom_call.1} parent=1 // pred_region
      %429 = dma.done [#allocation7], 16
    $region25: #{tpu_custom_call.1} parent=1 // pred_fallthru
      _
    %430 = vsyncpa [#allocation6], 1
    %431 = vsyncpa [#allocation7], 1

</llo_original>
